<compile_context>
chip_gen: v7x
topology: tpu7x:2x2x1
jax: 0.10.0
libtpu: 0.0.40
codegen_flags: <defaults>
</compile_context>

<pallas_src>
import jax
import jax.numpy as jnp
import numpy as np
from jax.experimental import pallas as pl
from jax.experimental.pallas import tpu as pltpu

# ---------------- model config: BasicMLP(input_dim=4, hidden_dims=[32, 32]) ----------------
INPUT_DIM = 4
HIDDEN_1 = 32
HIDDEN_2 = 32
BATCH = 16


def mlp_kernel(x_ref, t_ref, w1x_ref, w1t_ref, b1_ref,
               w2_ref, b2_ref, w3_ref, b3_ref, o_ref):
    """One batch tile: full BasicMLP forward, everything resident in VMEM."""
    x = x_ref[...].astype(jnp.float32)          # (tb, d)
    t = t_ref[...].astype(jnp.float32)          # (tb, 1)

    # Linear(d+1, h1): concat([x, t], -1) @ W1 == x @ W1[:d] + t * W1[d:d+1]
    # (avoids an in-kernel concat; the (tb,1)*(1,h1) broadcast is a cheap VPU op)
    h = (jnp.dot(x, w1x_ref[...], preferred_element_type=jnp.float32)
         + t * w1t_ref[...]
         + b1_ref[...])

    # SiLU: keep exp/logistic on the EUP slot.
    h = h * jax.nn.sigmoid(h)

    # Linear(h1, h2) — last hidden layer in the BasicMLP loop has no activation.
    h = jnp.dot(h, w2_ref[...], preferred_element_type=jnp.float32) + b2_ref[...]

    # Final Linear(h2, d) -> approximate vector field (the module's output).
    vf = jnp.dot(h, w3_ref[...], preferred_element_type=jnp.float32) + b3_ref[...]

    o_ref[...] = vf.astype(o_ref.dtype)


def basic_mlp_forward(x, t, params, *, tile_b=None):
    """Pallas wrapper for BasicMLP.forward(x, t)."""
    bs, d = x.shape
    w1x, w1t, b1, w2, b2, w3, b3 = params
    h1 = w1x.shape[1]
    h2 = w2.shape[1]

    # Single grid step by default: the whole (batch, feature) problem fits in VMEM.
    if tile_b is None:
        tile_b = bs
    num_tiles = pl.cdiv(bs, tile_b)

    # Small weights: full-array blocks, constant index_map -> resident across the grid.
    full = lambda shape: pl.BlockSpec(shape, lambda i: (0, 0))

    grid_spec = pl.GridSpec(
        grid=(num_tiles,),
        in_specs=[
            pl.BlockSpec((tile_b, d), lambda i: (i, 0)),   # x
            pl.BlockSpec((tile_b, 1), lambda i: (i, 0)),   # t
            full((d, h1)),                                  # W1 (x rows)
            full((1, h1)),                                  # W1 (t row)
            full((1, h1)),                                  # b1
            full((h1, h2)),                                 # W2
            full((1, h2)),                                  # b2
            full((h2, d)),                                  # W3
            full((1, d)),                                   # b3
        ],
        out_specs=pl.BlockSpec((tile_b, d), lambda i: (i, 0)),
    )

    # Only ask for megacore sharding when there is real work per TensorCore.
    sem = ("parallel",) if num_tiles > 1 else ("arbitrary",)

    return pl.pallas_call(
        mlp_kernel,
        out_shape=jax.ShapeDtypeStruct((bs, d), x.dtype),
        grid_spec=grid_spec,
        compiler_params=pltpu.CompilerParams(dimension_semantics=sem),
    )(x, t, w1x, w1t, b1, w2, b2, w3, b3)


def reference(x, t, params):
    """Pure-JAX reference of the PyTorch BasicMLP.forward."""
    w1x, w1t, b1, w2, b2, w3, b3 = params
    w1 = jnp.concatenate([w1x, w1t], axis=0)                  # (d+1, h1)
    h = jnp.concatenate([x, t], axis=-1) @ w1 + b1
    h = h * jax.nn.sigmoid(h)
    h = h @ w2 + b2
    return h @ w3 + b3


def init_params(key, d, h1, h2):
    """Deterministic synthetic init (Kaiming-uniform-ish, like nn.Linear defaults)."""
    def lin(k, fan_in, fan_out):
        bound = 1.0 / np.sqrt(fan_in)
        kw, kb = jax.random.split(k)
        w = jax.random.uniform(kw, (fan_in, fan_out), jnp.float32, -bound, bound)
        b = jax.random.uniform(kb, (1, fan_out), jnp.float32, -bound, bound)
        return w, b
    ks = jax.random.split(key, 3)
    w1, b1 = lin(ks[0], d + 1, h1)     # Linear(d+1, h1)
    w2, b2 = lin(ks[1], h1, h2)        # Linear(h1, h2)
    w3, b3 = lin(ks[2], h2, d)         # Linear(h2, d)
    w1x, w1t = w1[:d, :], w1[d:d + 1, :]
    return (w1x, w1t, b1, w2, b2, w3, b3)


if __name__ == "__main__":
    key = jax.random.PRNGKey(0)
    kx, kt, kp = jax.random.split(key, 3)

    x = jax.random.normal(kx, (BATCH, INPUT_DIM), dtype=jnp.float32)
    t = jax.random.uniform(kt, (BATCH, 1), jnp.float32, 0.0, 1.0)
    params = init_params(kp, INPUT_DIM, HIDDEN_1, HIDDEN_2)

    out = jax.block_until_ready(basic_mlp_forward(x, t, params))
    ref = jax.block_until_ready(reference(x, t, params))
    np.testing.assert_allclose(np.asarray(out), np.asarray(ref), rtol=1e-5, atol=1e-5)

    print("KERNEL_OK")
</pallas_src>

<mosaic_0001>
module attributes {stable_mosaic.version = 11 : i64} {
  func.func @mlp_kernel(%arg0: i32, %arg1: memref<16x4xf32, #tpu.memory_space<vmem>>, %arg2: memref<16x1xf32, #tpu.memory_space<vmem>>, %arg3: memref<4x32xf32, #tpu.memory_space<vmem>>, %arg4: memref<1x32xf32, #tpu.memory_space<vmem>>, %arg5: memref<1x32xf32, #tpu.memory_space<vmem>>, %arg6: memref<32x32xf32, #tpu.memory_space<vmem>>, %arg7: memref<1x32xf32, #tpu.memory_space<vmem>>, %arg8: memref<32x4xf32, #tpu.memory_space<vmem>>, %arg9: memref<1x4xf32, #tpu.memory_space<vmem>>, %arg10: memref<16x4xf32, #tpu.memory_space<vmem>>) attributes {dimension_semantics = [#tpu.dimension_semantics<arbitrary>], iteration_bounds = array<i64: 1>, scalar_prefetch = 0 : i64, scratch_operands = 0 : i64, tpu.core_type = #tpu.core_type<tc>, window_params = [{transform_indices = @transform_0, window_bounds = array<i64: 16, 4>}, {transform_indices = @transform_1, window_bounds = array<i64: 16, 1>}, {pipeline_mode = #tpu.pipeline_mode<synchronous>, transform_indices = @transform_2, window_bounds = array<i64: 4, 32>}, {pipeline_mode = #tpu.pipeline_mode<synchronous>, transform_indices = @transform_3, window_bounds = array<i64: 1, 32>}, {pipeline_mode = #tpu.pipeline_mode<synchronous>, transform_indices = @transform_4, window_bounds = array<i64: 1, 32>}, {pipeline_mode = #tpu.pipeline_mode<synchronous>, transform_indices = @transform_5, window_bounds = array<i64: 32, 32>}, {pipeline_mode = #tpu.pipeline_mode<synchronous>, transform_indices = @transform_6, window_bounds = array<i64: 1, 32>}, {pipeline_mode = #tpu.pipeline_mode<synchronous>, transform_indices = @transform_7, window_bounds = array<i64: 32, 4>}, {pipeline_mode = #tpu.pipeline_mode<synchronous>, transform_indices = @transform_8, window_bounds = array<i64: 1, 4>}, {transform_indices = @transform_9, window_bounds = array<i64: 16, 4>}]} {
    %c0 = arith.constant 0 : index
    %c0_0 = arith.constant 0 : index
    %0 = vector.load %arg1[%c0, %c0_0] : memref<16x4xf32, #tpu.memory_space<vmem>>, vector<16x4xf32>
    %c0_1 = arith.constant 0 : index
    %c0_2 = arith.constant 0 : index
    %1 = vector.load %arg2[%c0_1, %c0_2] : memref<16x1xf32, #tpu.memory_space<vmem>>, vector<16x1xf32>
    %c0_3 = arith.constant 0 : index
    %c0_4 = arith.constant 0 : index
    %2 = vector.load %arg3[%c0_3, %c0_4] : memref<4x32xf32, #tpu.memory_space<vmem>>, vector<4x32xf32>
    %cst = arith.constant dense<0.000000e+00> : vector<16x32xf32>
    %3 = tpu.matmul %0, %2, %cst {dimension_numbers = #tpu.dot_dimension_numbers<[1], [0], [0], [1], [0, 0, 1, 1], [], []>} : vector<16x4xf32>, vector<4x32xf32>, vector<16x32xf32> -> vector<16x32xf32>
    %c0_5 = arith.constant 0 : index
    %c0_6 = arith.constant 0 : index
    %4 = vector.load %arg4[%c0_5, %c0_6] : memref<1x32xf32, #tpu.memory_space<vmem>>, vector<1x32xf32>
    %5 = vector.broadcast %1 : vector<16x1xf32> to vector<16x32xf32>
    %6 = vector.broadcast %4 : vector<1x32xf32> to vector<16x32xf32>
    %7 = arith.mulf %5, %6 : vector<16x32xf32>
    %8 = arith.addf %3, %7 : vector<16x32xf32>
    %c0_7 = arith.constant 0 : index
    %c0_8 = arith.constant 0 : index
    %9 = vector.load %arg5[%c0_7, %c0_8] : memref<1x32xf32, #tpu.memory_space<vmem>>, vector<1x32xf32>
    %10 = vector.broadcast %9 : vector<1x32xf32> to vector<16x32xf32>
    %11 = arith.addf %8, %10 : vector<16x32xf32>
    %12 = arith.negf %11 : vector<16x32xf32>
    %13 = math.exp %12 : vector<16x32xf32>
    %cst_9 = arith.constant 1.000000e+00 : f32
    %14 = vector.broadcast %cst_9 : f32 to vector<16x32xf32>
    %15 = arith.addf %14, %13 : vector<16x32xf32>
    %16 = arith.divf %14, %15 : vector<16x32xf32>
    %17 = arith.mulf %11, %16 : vector<16x32xf32>
    %c0_10 = arith.constant 0 : index
    %c0_11 = arith.constant 0 : index
    %18 = vector.load %arg6[%c0_10, %c0_11] : memref<32x32xf32, #tpu.memory_space<vmem>>, vector<32x32xf32>
    %cst_12 = arith.constant dense<0.000000e+00> : vector<16x32xf32>
    %19 = tpu.matmul %17, %18, %cst_12 {dimension_numbers = #tpu.dot_dimension_numbers<[1], [0], [0], [1], [0, 0, 1, 1], [], []>} : vector<16x32xf32>, vector<32x32xf32>, vector<16x32xf32> -> vector<16x32xf32>
    %c0_13 = arith.constant 0 : index
    %c0_14 = arith.constant 0 : index
    %20 = vector.load %arg7[%c0_13, %c0_14] : memref<1x32xf32, #tpu.memory_space<vmem>>, vector<1x32xf32>
    %21 = vector.broadcast %20 : vector<1x32xf32> to vector<16x32xf32>
    %22 = arith.addf %19, %21 : vector<16x32xf32>
    %c0_15 = arith.constant 0 : index
    %c0_16 = arith.constant 0 : index
    %23 = vector.load %arg8[%c0_15, %c0_16] : memref<32x4xf32, #tpu.memory_space<vmem>>, vector<32x4xf32>
    %cst_17 = arith.constant dense<0.000000e+00> : vector<16x4xf32>
    %24 = tpu.matmul %22, %23, %cst_17 {dimension_numbers = #tpu.dot_dimension_numbers<[1], [0], [0], [1], [0, 0, 1, 1], [], []>} : vector<16x32xf32>, vector<32x4xf32>, vector<16x4xf32> -> vector<16x4xf32>
    %c0_18 = arith.constant 0 : index
    %c0_19 = arith.constant 0 : index
    %25 = vector.load %arg9[%c0_18, %c0_19] : memref<1x4xf32, #tpu.memory_space<vmem>>, vector<1x4xf32>
    %26 = vector.broadcast %25 : vector<1x4xf32> to vector<16x4xf32>
    %27 = arith.addf %24, %26 : vector<16x4xf32>
    %c0_20 = arith.constant 0 : index
    %c0_21 = arith.constant 0 : index
    %28 = vector.load %arg10[%c0_20, %c0_21] : memref<16x4xf32, #tpu.memory_space<vmem>>, vector<16x4xf32>
    tpu.vector_store %arg10[%c0_20, %c0_21], %27 {strides = array<i32>} : memref<16x4xf32, #tpu.memory_space<vmem>>, vector<16x4xf32>,
    return
  }
  func.func @transform_0(%arg0: i32) -> (i32, i32) {
    %c0_i32 = arith.constant 0 : i32
    %c0_i32_0 = arith.constant 0 : i32
    return %arg0, %c0_i32 : i32, i32
  }
  func.func @transform_1(%arg0: i32) -> (i32, i32) {
    %c0_i32 = arith.constant 0 : i32
    %c0_i32_0 = arith.constant 0 : i32
    return %arg0, %c0_i32 : i32, i32
  }
  func.func @transform_2(%arg0: i32) -> (i32, i32) {
    %c0_i32 = arith.constant 0 : i32
    %c0_i32_0 = arith.constant 0 : i32
    %c0_i32_1 = arith.constant 0 : i32
    return %c0_i32, %c0_i32_0 : i32, i32
  }
  func.func @transform_3(%arg0: i32) -> (i32, i32) {
    %c0_i32 = arith.constant 0 : i32
    %c0_i32_0 = arith.constant 0 : i32
    %c0_i32_1 = arith.constant 0 : i32
    return %c0_i32, %c0_i32_0 : i32, i32
  }
  func.func @transform_4(%arg0: i32) -> (i32, i32) {
    %c0_i32 = arith.constant 0 : i32
    %c0_i32_0 = arith.constant 0 : i32
    %c0_i32_1 = arith.constant 0 : i32
    return %c0_i32, %c0_i32_0 : i32, i32
  }
  func.func @transform_5(%arg0: i32) -> (i32, i32) {
    %c0_i32 = arith.constant 0 : i32
    %c0_i32_0 = arith.constant 0 : i32
    %c0_i32_1 = arith.constant 0 : i32
    return %c0_i32, %c0_i32_0 : i32, i32
  }
  func.func @transform_6(%arg0: i32) -> (i32, i32) {
    %c0_i32 = arith.constant 0 : i32
    %c0_i32_0 = arith.constant 0 : i32
    %c0_i32_1 = arith.constant 0 : i32
    return %c0_i32, %c0_i32_0 : i32, i32
  }
  func.func @transform_7(%arg0: i32) -> (i32, i32) {
    %c0_i32 = arith.constant 0 : i32
    %c0_i32_0 = arith.constant 0 : i32
    %c0_i32_1 = arith.constant 0 : i32
    return %c0_i32, %c0_i32_0 : i32, i32
  }
  func.func @transform_8(%arg0: i32) -> (i32, i32) {
    %c0_i32 = arith.constant 0 : i32
    %c0_i32_0 = arith.constant 0 : i32
    %c0_i32_1 = arith.constant 0 : i32
    return %c0_i32, %c0_i32_0 : i32, i32
  }
  func.func @transform_9(%arg0: i32) -> (i32, i32) {
    %c0_i32 = arith.constant 0 : i32
    %c0_i32_0 = arith.constant 0 : i32
    return %arg0, %c0_i32 : i32, i32
  }
}

</mosaic_0001>

<llo_original>
// kernel: tpu_custom_call.1
$region0: #{tpu_custom_call.1}
  #allocation0 [shape = 'u32[]', space=smem, size = 0x4, offset = 0x4, fixed_abs, tag = 'smem constant byte address 0x4 - core index']
  #allocation1 [shape = 'u32[144,128]{1,0:T(1,128)}', space=vmem, size = 0x12000, scoped, tag = 'internal scratch']
  %s0 = inlined_call_operand.vmem [shape: f32[16,4], index: 0, kind: input, shape index: {}]
  %s1 = inlined_call_operand.vmem [shape: f32[16,1], index: 1, kind: input, shape index: {}]
  %s2 = inlined_call_operand.vmem [shape: f32[4,32], index: 2, kind: input, shape index: {}]
  %s3 = inlined_call_operand.vmem [shape: f32[1,32], index: 3, kind: input, shape index: {}]
  %s4 = inlined_call_operand.vmem [shape: f32[1,32], index: 4, kind: input, shape index: {}]
  %s5 = inlined_call_operand.vmem [shape: f32[32,32], index: 5, kind: input, shape index: {}]
  %s6 = inlined_call_operand.vmem [shape: f32[1,32], index: 6, kind: input, shape index: {}]
  %s7 = inlined_call_operand.vmem [shape: f32[32,4], index: 7, kind: input, shape index: {}]
  %s8 = inlined_call_operand.vmem [shape: f32[1,4], index: 8, kind: input, shape index: {}]
  %s9 = inlined_call_operand.vmem [shape: f32[16,4], index: 9, kind: output, shape index: {}]
  %s10 = sld [smem:[#allocation0]]
  $region46: #{tpu_custom_call.1} parent=0
    _
  %s12 = ssub.s32 1, %s10
  %s13 = scalar_select 0, %s12, %s10
  // Predicated region
  $region2: #{tpu_custom_call.1} parent=0 // pred_check
    _
  $region3: #{tpu_custom_call.1} parent=0 // pred_check_branch
    %15 = sbr.rel (0) target = $region5
  $region4: #{tpu_custom_call.1} parent=0 // pred_region
    _
  $region5: #{tpu_custom_call.1} parent=0 // pred_fallthru
    _
  // Predicated region
  $region6: #{tpu_custom_call.1} parent=0 // pred_check
    _
  $region7: #{tpu_custom_call.1} parent=0 // pred_check_branch
    %17 = sbr.rel (0) target = $region9
  $region8: #{tpu_custom_call.1} parent=0 // pred_region
    _
  $region9: #{tpu_custom_call.1} parent=0 // pred_fallthru
    _
  // Predicated region
  $region10: #{tpu_custom_call.1} parent=0 // pred_check
    _
  $region11: #{tpu_custom_call.1} parent=0 // pred_check_branch
    %19 = sbr.rel (0) target = $region13
  $region12: #{tpu_custom_call.1} parent=0 // pred_region
    _
  $region13: #{tpu_custom_call.1} parent=0 // pred_fallthru
    _
  // Predicated region
  $region14: #{tpu_custom_call.1} parent=0 // pred_check
    _
  $region15: #{tpu_custom_call.1} parent=0 // pred_check_branch
    %21 = sbr.rel (0) target = $region17
  $region16: #{tpu_custom_call.1} parent=0 // pred_region
    _
  $region17: #{tpu_custom_call.1} parent=0 // pred_fallthru
    _
  // Predicated region
  $region18: #{tpu_custom_call.1} parent=0 // pred_check
    _
  $region19: #{tpu_custom_call.1} parent=0 // pred_check_branch
    %23 = sbr.rel (0) target = $region21
  $region20: #{tpu_custom_call.1} parent=0 // pred_region
    _
  $region21: #{tpu_custom_call.1} parent=0 // pred_fallthru
    _
  // Predicated region
  $region22: #{tpu_custom_call.1} parent=0 // pred_check
    _
  $region23: #{tpu_custom_call.1} parent=0 // pred_check_branch
    %25 = sbr.rel (0) target = $region25
  $region24: #{tpu_custom_call.1} parent=0 // pred_region
    _
  $region25: #{tpu_custom_call.1} parent=0 // pred_fallthru
    _
  // Predicated region
  $region26: #{tpu_custom_call.1} parent=0 // pred_check
    _
  $region27: #{tpu_custom_call.1} parent=0 // pred_check_branch
    %27 = sbr.rel (0) target = $region29
  $region28: #{tpu_custom_call.1} parent=0 // pred_region
    _
  $region29: #{tpu_custom_call.1} parent=0 // pred_fallthru
    _
  // Predicated region
  $region30: #{tpu_custom_call.1} parent=0 // pred_check
    _
  $region31: #{tpu_custom_call.1} parent=0 // pred_check_branch
    %29 = sbr.rel (0) target = $region33
  $region32: #{tpu_custom_call.1} parent=0 // pred_region
    _
  $region33: #{tpu_custom_call.1} parent=0 // pred_fallthru
    _
  // Predicated region
  $region34: #{tpu_custom_call.1} parent=0 // pred_check
    _
  $region35: #{tpu_custom_call.1} parent=0 // pred_check_branch
    %31 = sbr.rel (0) target = $region37
  $region36: #{tpu_custom_call.1} parent=0 // pred_region
    _
  $region37: #{tpu_custom_call.1} parent=0 // pred_fallthru
    _
  %v32 = vld [vmem:[%s0] sm:$0xff]
  %v33 = vld [vmem:[%s0 + $0x8] sm:$0xff]
  %v34 = vld [vmem:[%s1] sm:$0xff]
  %v35 = vld [vmem:[%s1 + $0x8] sm:$0xff]
  %v36 = vld [vmem:[%s2] sm:$0xf]
  %v37 = vld [vmem:[%s3] sm:$0x1]
  %39 = vset.pattern.permute.xlu0 0
  %40 = vperm.xlu0 %39, %v34
  %v41 = vpop.permute.xlu0 %40
  %44 = vset.pattern.permute.xlu0 0
  %45 = vperm.xlu0 %44, %v35
  %v46 = vpop.permute.xlu0 %45
  %v49 = vlaneseq
  %v50 = vshrl.u32 %v49, 7
  %v51 = vsub.s32 0, %v50
  %v52 = vrot.slane %v37, %v51
  %v54 = vmul.f32 %v41, %v52
  %v55 = vmul.f32 %v46, %v52
  %vm56 = vcmask 31744
  %v58 = vsel %vm56, %v32, 0
  %v61 = vsel %vm56, %v33, 0
  %vm63 = vcmask 1043456
  %v65 = vsel %vm63, %v36, 0
  %67 = vmatprep.subr.mxu0 0.0
  %68 = vmatpush1.msra.mxu0 %v65
  %69 = vmatprep.subr.mxu0 0.0
  %70 = vmatpush1.msra.mxu0 0.0
  %71 = vmatprep.subr.mxu0 0.0
  %72 = vmatpush1.msra.mxu0 0.0
  %73 = vmatprep.subr.mxu0 0.0
  %74 = vmatpush1.msra.mxu0 0.0
  %75 = vmatprep.subr.mxu0 0.0
  %76 = vmatpush1.msra.mxu0 0.0
  %77 = vmatprep.subr.mxu0 0.0
  %78 = vmatpush1.msra.mxu0 0.0
  %79 = vmatprep.subr.mxu0 0.0
  %80 = vmatpush1.msra.mxu0 0.0
  %81 = vmatprep.subr.mxu0 0.0
  %82 = vmatpush1.msra.mxu0 0.0
  %83 = vmatprep.subr.mxu0 0.0
  %84 = vmatpush1.msra.mxu0 0.0
  %85 = vmatprep.subr.mxu0 0.0
  %86 = vmatpush1.msra.mxu0 0.0
  %87 = vmatprep.subr.mxu0 0.0
  %88 = vmatpush1.msra.mxu0 0.0
  %89 = vmatprep.subr.mxu0 0.0
  %90 = vmatpush1.msra.mxu0 0.0
  %91 = vmatprep.subr.mxu0 0.0
  %92 = vmatpush1.msra.mxu0 0.0
  %93 = vmatprep.subr.mxu0 0.0
  %94 = vmatpush1.msra.mxu0 0.0
  %95 = vmatprep.subr.mxu0 0.0
  %96 = vmatpush1.msra.mxu0 0.0
  %97 = vmatprep.subr.mxu0 0.0
  %98 = vmatpush1.msra.mxu0 0.0
  %99 = vmatprep.subr.mxu0 0.0
  %100 = vmatpush1.msra.mxu0 0.0
  %101 = vmatprep.subr.mxu0 0.0
  %102 = vmatpush1.msra.mxu0 0.0
  %103 = vmatprep.subr.mxu0 0.0
  %104 = vmatpush1.msra.mxu0 0.0
  %105 = vmatprep.subr.mxu0 0.0
  %106 = vmatpush1.msra.mxu0 0.0
  %107 = vmatprep.subr.mxu0 0.0
  %108 = vmatpush1.msra.mxu0 0.0
  %109 = vmatprep.subr.mxu0 0.0
  %110 = vmatpush1.msra.mxu0 0.0
  %111 = vmatprep.subr.mxu0 0.0
  %112 = vmatpush1.msra.mxu0 0.0
  %113 = vmatprep.subr.mxu0 0.0
  %114 = vmatpush1.msra.mxu0 0.0
  %115 = vmatprep.subr.mxu0 0.0
  %116 = vmatpush1.msra.mxu0 0.0
  %117 = vmatprep.subr.mxu0 0.0
  %118 = vmatpush1.msra.mxu0 0.0
  %119 = vmatprep.subr.mxu0 0.0
  %120 = vmatpush1.msra.mxu0 0.0
  %121 = vmatprep.subr.mxu0 0.0
  %122 = vmatpush1.msra.mxu0 0.0
  %123 = vmatprep.subr.mxu0 0.0
  %124 = vmatpush1.msra.mxu0 0.0
  %125 = vmatprep.subr.mxu0 0.0
  %126 = vmatpush1.msra.mxu0 0.0
  %127 = vmatprep.subr.mxu0 0.0
  %128 = vmatpush1.msra.mxu0 0.0
  %129 = vmatprep.subr.mxu0 0.0
  %130 = vmatpush1.msra.mxu0 0.0
  %131 = vmatprep.mubr.f32.mxu0 0.0
  %132 = vmatmul.mubr.f32.gmra.mrb[0].mxu0 %v58
  %v133 = vpop.f32.mrb[0].mxu0
  %v134 = vadd.f32 %v54, %v133
  %v135 = vpop.f32.mrb[0].mxu0
  %136 = vmatprep.mubr.f32.mxu0 0.0
  %137 = vmatmul.mubr.f32.gmra.mrb[0].mxu0 %v61
  %v138 = vpop.f32.mrb[0].mxu0
  %v139 = vadd.f32 %v55, %v138
  %v140 = vpop.f32.mrb[0].mxu0
  %141 = vdwg.mxu0
  %v142 = vld [vmem:[%s4] sm:$0x1]
  %v144 = vlaneseq
  %v145 = vshrl.u32 %v144, 7
  %v146 = vsub.s32 0, %v145
  %v147 = vrot.slane %v142, %v146
  %v149 = vadd.f32 %v134, %v147
  %v150 = vadd.f32 %v139, %v147
  %v151 = vxor.u32 %v149, 2147483648
  %v152 = vxor.u32 %v150, 2147483648
  %v153 = vmul.f32 %v151, 1.442695
  %v154 = vpow.pop %v153
  %v155 = vmul.f32 %v152, 1.442695
  %v156 = vpow.pop %v155
  %v157 = vadd.f32 %v154, 1.0
  %v158 = vadd.f32 %v156, 1.0
  %v159 = vrcp.pop %v157
  %v160 = vmul.f32 1.0, %v159
  %v161 = vrcp.pop %v158
  %v162 = vmul.f32 1.0, %v161
  %v163 = vmul.f32 %v149, %v160
  %v164 = vmul.f32 %v150, %v162
  %v165 = vld [vmem:[%s5] sm:$0xff]
  %v166 = vld [vmem:[%s5 + $0x8] sm:$0xff]
  %v167 = vld [vmem:[%s5 + $0x10] sm:$0xff]
  %v168 = vld [vmem:[%s5 + $0x18] sm:$0xff]
  %v169 = vld [vmem:[%s6] sm:$0x1]
  %v171 = vlaneseq
  %v172 = vshrl.u32 %v171, 7
  %v173 = vsub.s32 0, %v172
  %v174 = vrot.slane %v169, %v173
  %vm176 = vcmask 261120
  %v178 = vsel %vm176, %v163, 0
  %v181 = vsel %vm176, %v164, 0
  %183 = vmatprep.subr.mxu0 0.0
  %184 = vmatpush1.msra.mxu0 %v165
  %185 = vmatprep.subr.mxu0 0.0
  %186 = vmatpush1.msra.mxu0 %v166
  %187 = vmatprep.subr.mxu0 0.0
  %188 = vmatpush1.msra.mxu0 %v167
  %189 = vmatprep.subr.mxu0 0.0
  %190 = vmatpush1.msra.mxu0 %v168
  %191 = vmatprep.subr.mxu0 0.0
  %192 = vmatpush1.msra.mxu0 0.0
  %193 = vmatprep.subr.mxu0 0.0
  %194 = vmatpush1.msra.mxu0 0.0
  %195 = vmatprep.subr.mxu0 0.0
  %196 = vmatpush1.msra.mxu0 0.0
  %197 = vmatprep.subr.mxu0 0.0
  %198 = vmatpush1.msra.mxu0 0.0
  %199 = vmatprep.subr.mxu0 0.0
  %200 = vmatpush1.msra.mxu0 0.0
  %201 = vmatprep.subr.mxu0 0.0
  %202 = vmatpush1.msra.mxu0 0.0
  %203 = vmatprep.subr.mxu0 0.0
  %204 = vmatpush1.msra.mxu0 0.0
  %205 = vmatprep.subr.mxu0 0.0
  %206 = vmatpush1.msra.mxu0 0.0
  %207 = vmatprep.subr.mxu0 0.0
  %208 = vmatpush1.msra.mxu0 0.0
  %209 = vmatprep.subr.mxu0 0.0
  %210 = vmatpush1.msra.mxu0 0.0
  %211 = vmatprep.subr.mxu0 0.0
  %212 = vmatpush1.msra.mxu0 0.0
  %213 = vmatprep.subr.mxu0 0.0
  %214 = vmatpush1.msra.mxu0 0.0
  %215 = vmatprep.subr.mxu0 0.0
  %216 = vmatpush1.msra.mxu0 0.0
  %217 = vmatprep.subr.mxu0 0.0
  %218 = vmatpush1.msra.mxu0 0.0
  %219 = vmatprep.subr.mxu0 0.0
  %220 = vmatpush1.msra.mxu0 0.0
  %221 = vmatprep.subr.mxu0 0.0
  %222 = vmatpush1.msra.mxu0 0.0
  %223 = vmatprep.subr.mxu0 0.0
  %224 = vmatpush1.msra.mxu0 0.0
  %225 = vmatprep.subr.mxu0 0.0
  %226 = vmatpush1.msra.mxu0 0.0
  %227 = vmatprep.subr.mxu0 0.0
  %228 = vmatpush1.msra.mxu0 0.0
  %229 = vmatprep.subr.mxu0 0.0
  %230 = vmatpush1.msra.mxu0 0.0
  %231 = vmatprep.subr.mxu0 0.0
  %232 = vmatpush1.msra.mxu0 0.0
  %233 = vmatprep.subr.mxu0 0.0
  %234 = vmatpush1.msra.mxu0 0.0
  %235 = vmatprep.subr.mxu0 0.0
  %236 = vmatpush1.msra.mxu0 0.0
  %237 = vmatprep.subr.mxu0 0.0
  %238 = vmatpush1.msra.mxu0 0.0
  %239 = vmatprep.subr.mxu0 0.0
  %240 = vmatpush1.msra.mxu0 0.0
  %241 = vmatprep.subr.mxu0 0.0
  %242 = vmatpush1.msra.mxu0 0.0
  %243 = vmatprep.subr.mxu0 0.0
  %244 = vmatpush1.msra.mxu0 0.0
  %245 = vmatprep.subr.mxu0 0.0
  %246 = vmatpush1.msra.mxu0 0.0
  %247 = vmatprep.mubr.f32.mxu0 0.0
  %248 = vmatmul.mubr.f32.gmra.mrb[0].mxu0 %v178
  %v249 = vpop.f32.mrb[0].mxu0
  %v250 = vadd.f32 %v174, %v249
  %v251 = vpop.f32.mrb[0].mxu0
  %252 = vmatprep.mubr.f32.mxu0 0.0
  %253 = vmatmul.mubr.f32.gmra.mrb[0].mxu0 %v181
  %v254 = vpop.f32.mrb[0].mxu0
  %v255 = vadd.f32 %v174, %v254
  %v256 = vpop.f32.mrb[0].mxu0
  %257 = vdwg.mxu0
  %v258 = vld [vmem:[%s7] sm:$0xff]
  %v259 = vld [vmem:[%s7 + $0x8] sm:$0xff]
  %v260 = vld [vmem:[%s7 + $0x10] sm:$0xff]
  %v261 = vld [vmem:[%s7 + $0x18] sm:$0xff]
  %v262 = vld [vmem:[%s8] sm:$0x1]
  %v264 = vlaneseq
  %v265 = vshrl.u32 %v264, 7
  %v266 = vsub.s32 0, %v265
  %v267 = vrot.slane %v262, %v266
  %v270 = vsel %vm176, %v250, 0
  %v273 = vsel %vm176, %v255, 0
  %275 = vmatprep.subr.mxu0 0.0
  %276 = vmatpush1.msra.mxu0 %v258
  %277 = vmatprep.subr.mxu0 0.0
  %278 = vmatpush1.msra.mxu0 %v259
  %279 = vmatprep.subr.mxu0 0.0
  %280 = vmatpush1.msra.mxu0 %v260
  %281 = vmatprep.subr.mxu0 0.0
  %282 = vmatpush1.msra.mxu0 %v261
  %283 = vmatprep.subr.mxu0 0.0
  %284 = vmatpush1.msra.mxu0 0.0
  %285 = vmatprep.subr.mxu0 0.0
  %286 = vmatpush1.msra.mxu0 0.0
  %287 = vmatprep.subr.mxu0 0.0
  %288 = vmatpush1.msra.mxu0 0.0
  %289 = vmatprep.subr.mxu0 0.0
  %290 = vmatpush1.msra.mxu0 0.0
  %291 = vmatprep.subr.mxu0 0.0
  %292 = vmatpush1.msra.mxu0 0.0
  %293 = vmatprep.subr.mxu0 0.0
  %294 = vmatpush1.msra.mxu0 0.0
  %295 = vmatprep.subr.mxu0 0.0
  %296 = vmatpush1.msra.mxu0 0.0
  %297 = vmatprep.subr.mxu0 0.0
  %298 = vmatpush1.msra.mxu0 0.0
  %299 = vmatprep.subr.mxu0 0.0
  %300 = vmatpush1.msra.mxu0 0.0
  %301 = vmatprep.subr.mxu0 0.0
  %302 = vmatpush1.msra.mxu0 0.0
  %303 = vmatprep.subr.mxu0 0.0
  %304 = vmatpush1.msra.mxu0 0.0
  %305 = vmatprep.subr.mxu0 0.0
  %306 = vmatpush1.msra.mxu0 0.0
  %307 = vmatprep.subr.mxu0 0.0
  %308 = vmatpush1.msra.mxu0 0.0
  %309 = vmatprep.subr.mxu0 0.0
  %310 = vmatpush1.msra.mxu0 0.0
  %311 = vmatprep.subr.mxu0 0.0
  %312 = vmatpush1.msra.mxu0 0.0
  %313 = vmatprep.subr.mxu0 0.0
  %314 = vmatpush1.msra.mxu0 0.0
  %315 = vmatprep.subr.mxu0 0.0
  %316 = vmatpush1.msra.mxu0 0.0
  %317 = vmatprep.subr.mxu0 0.0
  %318 = vmatpush1.msra.mxu0 0.0
  %319 = vmatprep.subr.mxu0 0.0
  %320 = vmatpush1.msra.mxu0 0.0
  %321 = vmatprep.subr.mxu0 0.0
  %322 = vmatpush1.msra.mxu0 0.0
  %323 = vmatprep.subr.mxu0 0.0
  %324 = vmatpush1.msra.mxu0 0.0
  %325 = vmatprep.subr.mxu0 0.0
  %326 = vmatpush1.msra.mxu0 0.0
  %327 = vmatprep.subr.mxu0 0.0
  %328 = vmatpush1.msra.mxu0 0.0
  %329 = vmatprep.subr.mxu0 0.0
  %330 = vmatpush1.msra.mxu0 0.0
  %331 = vmatprep.subr.mxu0 0.0
  %332 = vmatpush1.msra.mxu0 0.0
  %333 = vmatprep.subr.mxu0 0.0
  %334 = vmatpush1.msra.mxu0 0.0
  %335 = vmatprep.subr.mxu0 0.0
  %336 = vmatpush1.msra.mxu0 0.0
  %337 = vmatprep.subr.mxu0 0.0
  %338 = vmatpush1.msra.mxu0 0.0
  %339 = vmatprep.mubr.f32.mxu0 0.0
  %340 = vmatmul.mubr.f32.gmra.mrb[0].mxu0 %v270
  %v341 = vpop.f32.mrb[0].mxu0
  %v342 = vadd.f32 %v267, %v341
  %v343 = vpop.f32.mrb[0].mxu0
  %344 = vmatprep.mubr.f32.mxu0 0.0
  %345 = vmatmul.mubr.f32.gmra.mrb[0].mxu0 %v273
  %v346 = vpop.f32.mrb[0].mxu0
  %v347 = vadd.f32 %v267, %v346
  %v348 = vpop.f32.mrb[0].mxu0
  %349 = vdwg.mxu0
  %350 = vst.msk [vmem:[%s9] sm:$0xff] %vm56, %v342
  %351 = vst.msk [vmem:[%s9 + $0x8] sm:$0xff] %vm56, %v347
  // Predicated region
  $region38: #{tpu_custom_call.1} parent=0 // pred_check
    _
  $region39: #{tpu_custom_call.1} parent=0 // pred_check_branch
    %353 = sbr.rel (0) target = $region41
  $region40: #{tpu_custom_call.1} parent=0 // pred_region
    _
  $region41: #{tpu_custom_call.1} parent=0 // pred_fallthru
    _
  // Predicated region
  $region42: #{tpu_custom_call.1} parent=0 // pred_check
    _
  $region43: #{tpu_custom_call.1} parent=0 // pred_check_branch
    %355 = sbr.rel (0) target = $region45
  $region44: #{tpu_custom_call.1} parent=0 // pred_region
    _
  $region45: #{tpu_custom_call.1} parent=0 // pred_fallthru
    _

</llo_original>
